<compile_context>
chip_gen: v7x
topology: tpu7x:2x2x1
jax: 0.10.0
libtpu: 0.0.40
codegen_flags: <defaults>
</compile_context>

<pallas_src>
import functools
import math

import jax
import jax.numpy as jnp
from jax import lax
from jax.experimental import pallas as pl
from jax.experimental.pallas import tpu as pltpu

_LANE = 128
_SUBLANE = 8
_BUF_BUDGET_BYTES = 24 * 1024 * 1024   # double-buffered pipeline buffers
_VMEM_LIMIT_BYTES = 40 * 1024 * 1024   # safe on v5e/v6e (128 MiB) and v7x (64 MiB/TC)


def _round_up(x: int, m: int) -> int:
    return ((x + m - 1) // m) * m


def _crps_tile_kernel(pred_ref, tgt_ref, qpat_ref, expand_ref, out_ref, *,
                      rows_total: int, tile_rows: int):
    """One grid step: partial CRPS sum over a (tile_rows, C) lane-dense slab."""
    p = pred_ref[...]            # (tile_rows, C) f32
    t = tgt_ref[...]             # (tile_rows, G) f32
    qpat = qpat_ref[...]         # (1, C) f32  (quantile pattern, resident)
    expand = expand_ref[...]     # (G, C) f32  (0/1 expansion matrix, resident)

    # MXU: t_exp[r, c] = t[r, c // Q]  (exact — one nonzero term per column).
    t_exp = jnp.dot(t, expand, preferred_element_type=jnp.float32)  # (tile_rows, C)

    # (t - p) * (1[t <= p] - q); the constant 2/(N*Q) is folded out and applied
    # once in the wrapper.
    contrib = (t_exp - p) * jnp.where(t_exp <= p, 1.0 - qpat, -qpat)

    if rows_total % tile_rows != 0:
        # Edge block: rows past rows_total hold unspecified data -> select-mask
        # (select, not multiply, so garbage NaN/Inf cannot leak through).
        row_ids = lax.broadcasted_iota(jnp.int32, (tile_rows, 1), 0)
        valid = (pl.program_id(0) * tile_rows + row_ids) < rows_total
        contrib = jnp.where(valid, contrib, 0.0)

    lane_sum = jnp.sum(contrib, axis=1, keepdims=True)     # (tile_rows, 1)  (XLU)
    tile_sum = jnp.sum(lane_sum, axis=0, keepdims=True)    # (1, 1)
    out_ref[...] = jnp.broadcast_to(tile_sum[:, :, None], (1, 1, _LANE))


def crps_pallas(predictions: jax.Array, targets: jax.Array,
                quantiles: jax.Array, *, max_tile_rows: int | None = None) -> jax.Array:
    """predictions: (B, L, Q), targets: (B, L), quantiles: (Q,). Returns scalar CRPS."""
    B, L, Q = predictions.shape
    N = B * L
    n_elems = N * Q

    pred = predictions.astype(jnp.float32).reshape(N, Q)
    tgt = targets.astype(jnp.float32).reshape(N)
    q = quantiles.astype(jnp.float32)

    # Group G consecutive target-rows into one lane-dense row of C = G*Q.
    # G = gcd(N, 128) keeps the reshape a free bitcast (no HBM copy).
    G = math.gcd(N, _LANE)
    if G < _SUBLANE:
        # Rare path (N not a multiple of 8): zero-pad a few rows.  Zero rows
        # contribute exactly 0 (t = p = 0).  Only this path pays for a copy.
        pad = _round_up(N, _SUBLANE) - N
        pred = jnp.pad(pred, ((0, pad), (0, 0)))
        tgt = jnp.pad(tgt, ((0, pad),))
        Np = N + pad
        G = math.gcd(Np, _LANE)   # == 8
    else:
        Np = N

    C = G * Q
    R = Np // G
    pred2d = pred.reshape(R, C)    # free, contiguous reshape
    tgt2d = tgt.reshape(R, G)      # free, contiguous reshape

    # Small resident operands (a few KiB).
    qpat = jnp.tile(q, G).reshape(1, C)                            # (1, C)
    expand = jnp.repeat(jnp.eye(G, dtype=jnp.float32), Q, axis=1)  # (G, C)

    # VMEM-budgeted tile size: pred block pads to ceil(C/128)*128 lanes,
    # targets block pads to 128 lanes; x2 for default double buffering.
    padded_c = _round_up(C, _LANE)
    row_bytes = (padded_c + _LANE) * 4
    cap = max(_SUBLANE, (_BUF_BUDGET_BYTES // (2 * row_bytes)) // _SUBLANE * _SUBLANE)
    if max_tile_rows is not None:
        cap = min(cap, max(_SUBLANE, (max_tile_rows // _SUBLANE) * _SUBLANE))

    if R <= cap:
        tile_rows = R                                  # single full-dim block
    else:
        # Split into >= ~8 grid steps (pipelining + 2-TC sharding on v7x),
        # but never beyond the VMEM budget.
        tile_rows = min(cap, _round_up((R + 7) // 8, _SUBLANE))
    n_tiles = (R + tile_rows - 1) // tile_rows

    kernel = functools.partial(_crps_tile_kernel, rows_total=R, tile_rows=tile_rows)

    partials = pl.pallas_call(
        kernel,
        out_shape=jax.ShapeDtypeStruct((n_tiles, 1, _LANE), jnp.float32),
        grid=(n_tiles,),
        in_specs=[
            pl.BlockSpec((tile_rows, C), lambda i: (i, 0)),   # predictions slab
            pl.BlockSpec((tile_rows, G), lambda i: (i, 0)),   # targets slab
            pl.BlockSpec((1, C), lambda i: (0, 0)),           # quantile pattern (resident)
            pl.BlockSpec((G, C), lambda i: (0, 0)),           # expansion matrix (resident)
        ],
        out_specs=pl.BlockSpec((1, 1, _LANE), lambda i: (i, 0, 0)),
        compiler_params=pltpu.CompilerParams(
            dimension_semantics=("parallel",),
            vmem_limit_bytes=_VMEM_LIMIT_BYTES,
        ),
        cost_estimate=pl.CostEstimate(
            flops=2 * R * C * G + 5 * R * C,
            transcendentals=0,
            bytes_accessed=4 * (R * C + R * G + G * C + C + n_tiles * _LANE),
        ),
    )(pred2d, tgt2d, qpat, expand)

    # Per-tile partial sums -> scalar; apply the 2/(N*Q) mean scale exactly once.
    # TODO(synk): for N*Q >~ 1e8 consider a hierarchical final accumulation.
    return jnp.sum(partials[:, 0, 0]) * (2.0 / n_elems)


def crps_reference(predictions, targets, quantiles):
    t = targets[..., None]
    indicator = (t <= predictions).astype(jnp.float32)
    qv = quantiles.reshape(1, 1, -1)
    vals = 2.0 * (t - predictions) * (indicator - qv)
    return vals.mean(axis=-1).mean(axis=-1).mean()


if __name__ == "__main__":
    # Module's default quantile buffer.
    quantiles = jnp.asarray([0.1, 0.2, 0.3, 0.4, 0.5, 0.6, 0.7, 0.8, 0.9],
                            dtype=jnp.float32)

    # Case 1: small shapes from the forward spec (batch=2, prediction_length=8,
    # num_quantiles=9) -> single-tile path.
    key = jax.random.PRNGKey(0)
    kp, kt = jax.random.split(key)
    predictions = jax.random.normal(kp, (2, 8, 9), dtype=jnp.float32)
    targets = jax.random.normal(kt, (2, 8), dtype=jnp.float32)
    out = jax.block_until_ready(crps_pallas(predictions, targets, quantiles))
    ref = crps_reference(predictions, targets, quantiles)
    assert jnp.allclose(out, ref, atol=1e-5, rtol=1e-5), (out, ref)

    # Case 2: multi-tile grid + in-kernel edge masking (forced small tile).
    kp2, kt2 = jax.random.split(jax.random.PRNGKey(1))
    predictions2 = jax.random.normal(kp2, (4, 700, 9), dtype=jnp.float32)
    targets2 = jax.random.normal(kt2, (4, 700), dtype=jnp.float32)
    out2 = jax.block_until_ready(
        crps_pallas(predictions2, targets2, quantiles, max_tile_rows=64))
    ref2 = crps_reference(predictions2, targets2, quantiles)
    assert jnp.allclose(out2, ref2, atol=1e-5, rtol=1e-5), (out2, ref2)

    # Case 3: N not a multiple of 8 -> rare zero-pad fallback path.
    kp3, kt3 = jax.random.split(jax.random.PRNGKey(2))
    predictions3 = jax.random.normal(kp3, (3, 7, 9), dtype=jnp.float32)
    targets3 = jax.random.normal(kt3, (3, 7), dtype=jnp.float32)
    out3 = jax.block_until_ready(crps_pallas(predictions3, targets3, quantiles))
    ref3 = crps_reference(predictions3, targets3, quantiles)
    assert jnp.allclose(out3, ref3, atol=1e-5, rtol=1e-5), (out3, ref3)

    print("KERNEL_OK")
</pallas_src>

<mosaic_0001>
module attributes {stable_mosaic.version = 11 : i64} {
  func.func @_crps_tile_kernel(%arg0: i32, %arg1: memref<1x144xf32, #tpu.memory_space<vmem>>, %arg2: memref<1x16xf32, #tpu.memory_space<vmem>>, %arg3: memref<1x144xf32, #tpu.memory_space<vmem>>, %arg4: memref<16x144xf32, #tpu.memory_space<vmem>>, %arg5: memref<1x1x128xf32, #tpu.memory_space<vmem>>) attributes {dimension_semantics = [#tpu.dimension_semantics<parallel>], iteration_bounds = array<i64: 1>, scalar_prefetch = 0 : i64, scratch_operands = 0 : i64, tpu.core_type = #tpu.core_type<tc>, window_params = [{transform_indices = @transform_0, window_bounds = array<i64: 1, 144>}, {transform_indices = @transform_1, window_bounds = array<i64: 1, 16>}, {pipeline_mode = #tpu.pipeline_mode<synchronous>, transform_indices = @transform_2, window_bounds = array<i64: 1, 144>}, {pipeline_mode = #tpu.pipeline_mode<synchronous>, transform_indices = @transform_3, window_bounds = array<i64: 16, 144>}, {transform_indices = @transform_4, window_bounds = array<i64: 1, 1, 128>}]} {
    %c0 = arith.constant 0 : index
    %c0_0 = arith.constant 0 : index
    %0 = vector.load %arg1[%c0, %c0_0] : memref<1x144xf32, #tpu.memory_space<vmem>>, vector<1x144xf32>
    %c0_1 = arith.constant 0 : index
    %c0_2 = arith.constant 0 : index
    %1 = vector.load %arg2[%c0_1, %c0_2] : memref<1x16xf32, #tpu.memory_space<vmem>>, vector<1x16xf32>
    %c0_3 = arith.constant 0 : index
    %c0_4 = arith.constant 0 : index
    %2 = vector.load %arg3[%c0_3, %c0_4] : memref<1x144xf32, #tpu.memory_space<vmem>>, vector<1x144xf32>
    %c0_5 = arith.constant 0 : index
    %c0_6 = arith.constant 0 : index
    %3 = vector.load %arg4[%c0_5, %c0_6] : memref<16x144xf32, #tpu.memory_space<vmem>>, vector<16x144xf32>
    %cst = arith.constant dense<0.000000e+00> : vector<1x144xf32>
    %4 = tpu.matmul %1, %3, %cst {dimension_numbers = #tpu.dot_dimension_numbers<[1], [0], [0], [1], [0, 0, 1, 1], [], []>} : vector<1x16xf32>, vector<16x144xf32>, vector<1x144xf32> -> vector<1x144xf32>
    %5 = arith.subf %4, %0 : vector<1x144xf32>
    %6 = arith.cmpf ole, %4, %0 : vector<1x144xf32>
    %cst_7 = arith.constant 1.000000e+00 : f32
    %7 = vector.broadcast %cst_7 : f32 to vector<1x144xf32>
    %8 = arith.subf %7, %2 : vector<1x144xf32>
    %cst_8 = arith.constant 0.000000e+00 : f32
    %9 = vector.broadcast %cst_8 : f32 to vector<1x144xf32>
    %10 = arith.subf %9, %2 : vector<1x144xf32>
    %11 = arith.select %6, %8, %10 : vector<1x144xi1>, vector<1x144xf32>
    %12 = arith.mulf %5, %11 : vector<1x144xf32>
    %cst_9 = arith.constant dense<0.000000e+00> : vector<1xf32>
    %13 = vector.multi_reduction <add>, %12, %cst_9 [1] : vector<1x144xf32> to vector<1xf32>
    %14 = vector.shape_cast %13 : vector<1xf32> to vector<1x1xf32>
    %cst_10 = arith.constant dense<0.000000e+00> : vector<1xf32>
    %15 = vector.multi_reduction <add>, %14, %cst_10 [0] : vector<1x1xf32> to vector<1xf32>
    %16 = vector.shape_cast %15 : vector<1xf32> to vector<1x1xf32>
    %17 = vector.shape_cast %16 : vector<1x1xf32> to vector<1x1x1xf32>
    %18 = vector.shape_cast %17 : vector<1x1x1xf32> to vector<1x1x1xf32>
    %19 = vector.broadcast %18 : vector<1x1x1xf32> to vector<1x1x128xf32>
    %c0_11 = arith.constant 0 : index
    %c0_12 = arith.constant 0 : index
    %c0_13 = arith.constant 0 : index
    %20 = vector.load %arg5[%c0_11, %c0_12, %c0_13] : memref<1x1x128xf32, #tpu.memory_space<vmem>>, vector<1x1x128xf32>
    tpu.vector_store %arg5[%c0_11, %c0_12, %c0_13], %19 {strides = array<i32>} : memref<1x1x128xf32, #tpu.memory_space<vmem>>, vector<1x1x128xf32>,
    return
  }
  func.func @transform_0(%arg0: i32) -> (i32, i32) {
    %c0_i32 = arith.constant 0 : i32
    %c0_i32_0 = arith.constant 0 : i32
    return %arg0, %c0_i32 : i32, i32
  }
  func.func @transform_1(%arg0: i32) -> (i32, i32) {
    %c0_i32 = arith.constant 0 : i32
    %c0_i32_0 = arith.constant 0 : i32
    return %arg0, %c0_i32 : i32, i32
  }
  func.func @transform_2(%arg0: i32) -> (i32, i32) {
    %c0_i32 = arith.constant 0 : i32
    %c0_i32_0 = arith.constant 0 : i32
    %c0_i32_1 = arith.constant 0 : i32
    return %c0_i32, %c0_i32_0 : i32, i32
  }
  func.func @transform_3(%arg0: i32) -> (i32, i32) {
    %c0_i32 = arith.constant 0 : i32
    %c0_i32_0 = arith.constant 0 : i32
    %c0_i32_1 = arith.constant 0 : i32
    return %c0_i32, %c0_i32_0 : i32, i32
  }
  func.func @transform_4(%arg0: i32) -> (i32, i32, i32) {
    %c0_i32 = arith.constant 0 : i32
    %c0_i32_0 = arith.constant 0 : i32
    %c0_i32_1 = arith.constant 0 : i32
    return %arg0, %c0_i32, %c0_i32_0 : i32, i32, i32
  }
}

</mosaic_0001>

<llo_original>
// kernel: tpu_custom_call.1
$region0: #{tpu_custom_call.1}
  #allocation0 [shape = 'u32[]', space=smem, size = 0x4, offset = 0x4, fixed_abs, tag = 'smem constant byte address 0x4 - core index']
  #allocation1 [shape = 'u32[144,128]{1,0:T(1,128)}', space=vmem, size = 0x12000, scoped, tag = 'internal scratch']
  %s0 = inlined_call_operand.hbm [shape: f32[1,144], index: 0, kind: input, shape index: {}]
  %s1 = inlined_call_operand.vmem [shape: f32[1,16], index: 1, kind: input, shape index: {}]
  %s2 = inlined_call_operand.vmem [shape: f32[1,144], index: 2, kind: input, shape index: {}]
  %s3 = inlined_call_operand.hbm [shape: f32[16,144], index: 3, kind: input, shape index: {}]
  %s4 = inlined_call_operand.hbm [shape: f32[1,1,128], index: 4, kind: output, shape index: {}]
  %s5 = sld [smem:[#allocation0]]
  $region34: #{tpu_custom_call.1} parent=0
    _
  %s7 = ssub.s32 1, %s5
  %s8 = scalar_select 0, %s7, %s5
  $region1: #{tpu_custom_call.1} parent=0
    #allocation2 [shape = 'u8[1024]{0}', space=vmem, size = 0x400, scoped, tag = 'input window, operand 0, single buffered']
    #allocation3 [shape = 's32[1]{0}', space=sflag, size = 0x4, scoped, tag = 'scoped memory for tpu_custom_call.1']
    #allocation4 [shape = 's32[1]{0}', space=sflag, size = 0x4, scoped, tag = 'scoped memory for tpu_custom_call.1']
    #allocation5 [shape = 'u8[16384]{0}', space=vmem, size = 0x4000, scoped, tag = 'input window, operand 3, single buffered']
    #allocation6 [shape = 's32[1]{0}', space=sflag, size = 0x4, scoped, tag = 'scoped memory for tpu_custom_call.1']
    #allocation7 [shape = 'u8[512]{0}', space=vmem, size = 0x400, scoped, tag = 'output window, operand 0, single buffered']
    %9 = vsyncpa [#allocation3], 0
    %10 = vsyncpa [#allocation6], 0
    %11 = vsyncpa [#allocation4], 0
    // Predicated region
    $region2: #{tpu_custom_call.1} parent=1 // pred_check
      _
    $region3: #{tpu_custom_call.1} parent=1 // pred_check_branch
      %13 = sbr.rel (0) target = $region5
    $region4: #{tpu_custom_call.1} parent=1 // pred_region
      %s15 = ssub.s32 32, 32
      %16 = vsyncadd [#allocation3], %s15
      %s18 = sshll.u32 [#allocation2], 4
      %s19 = int_to_ptr.vmem [resolvable:$true] %s18
      %21 = dma.hbm_to_vmem [thread:$0]  %s0, 32, %s19, [#allocation3]
    $region5: #{tpu_custom_call.1} parent=1 // pred_fallthru
      _
    // Predicated region
    $region6: #{tpu_custom_call.1} parent=1 // pred_check
      _
    $region7: #{tpu_custom_call.1} parent=1 // pred_check_branch
      %23 = sbr.rel (0) target = $region9
    $region8: #{tpu_custom_call.1} parent=1 // pred_region
      _
    $region9: #{tpu_custom_call.1} parent=1 // pred_fallthru
      _
    // Predicated region
    $region10: #{tpu_custom_call.1} parent=1 // pred_check
      _
    $region11: #{tpu_custom_call.1} parent=1 // pred_check_branch
      %25 = sbr.rel (0) target = $region13
    $region12: #{tpu_custom_call.1} parent=1 // pred_region
      _
    $region13: #{tpu_custom_call.1} parent=1 // pred_fallthru
      _
    // Predicated region
    $region14: #{tpu_custom_call.1} parent=1 // pred_check
      _
    $region15: #{tpu_custom_call.1} parent=1 // pred_check_branch
      %27 = sbr.rel (0) target = $region17
    $region16: #{tpu_custom_call.1} parent=1 // pred_region
      %s29 = ssub.s32 512, 512
      %30 = vsyncadd [#allocation6], %s29
      %s31 = sshll.u32 [#allocation5], 4
      %s32 = int_to_ptr.vmem [resolvable:$true] %s31
      %37 = dma.hbm_to_vmem [thread:$0]  %s3, 512, %s32, [#allocation6], 256, 256, 16
    $region17: #{tpu_custom_call.1} parent=1 // pred_fallthru
      _
    // Predicated region
    $region18: #{tpu_custom_call.1} parent=1 // pred_check
      _
    $region19: #{tpu_custom_call.1} parent=1 // pred_check_branch
      %39 = sbr.rel (0) target = $region21
    $region20: #{tpu_custom_call.1} parent=1 // pred_region
      %40 = dma.done [#allocation3], 32
    $region21: #{tpu_custom_call.1} parent=1 // pred_fallthru
      _
    // Predicated region
    $region22: #{tpu_custom_call.1} parent=1 // pred_check
      _
    $region23: #{tpu_custom_call.1} parent=1 // pred_check_branch
      %42 = sbr.rel (0) target = $region25
    $region24: #{tpu_custom_call.1} parent=1 // pred_region
      %43 = dma.done [#allocation6], 512
    $region25: #{tpu_custom_call.1} parent=1 // pred_fallthru
      _
    %v44 = vld [vmem:[#allocation2] sm:$0x3]
    %v45 = vld [vmem:[%s1] sm:$0x1]
    %v46 = vld [vmem:[%s2] sm:$0x3]
    %v47 = vld [vmem:[#allocation5] sm:$0xff]
    %v48 = vld [vmem:[#allocation5 + $0x8] sm:$0xff]
    %v49 = vld [vmem:[#allocation5 + $0x10] sm:$0xff]
    %v50 = vld [vmem:[#allocation5 + $0x18] sm:$0xff]
    %vm51 = vcmask 130048
    %v53 = vsel %vm51, %v45, 0
    %55 = vmatprep.subr.mxu0 %v48
    %56 = vmatpush1.msra.mxu0 %v47
    %57 = vmatprep.subr.mxu0 %v50
    %58 = vmatpush1.msra.mxu0 %v49
    %59 = vmatprep.subr.mxu0 0.0
    %60 = vmatpush1.msra.mxu0 0.0
    %61 = vmatprep.subr.mxu0 0.0
    %62 = vmatpush1.msra.mxu0 0.0
    %63 = vmatprep.subr.mxu0 0.0
    %64 = vmatpush1.msra.mxu0 0.0
    %65 = vmatprep.subr.mxu0 0.0
    %66 = vmatpush1.msra.mxu0 0.0
    %67 = vmatprep.subr.mxu0 0.0
    %68 = vmatpush1.msra.mxu0 0.0
    %69 = vmatprep.subr.mxu0 0.0
    %70 = vmatpush1.msra.mxu0 0.0
    %71 = vmatprep.subr.mxu0 0.0
    %72 = vmatpush1.msra.mxu0 0.0
    %73 = vmatprep.subr.mxu0 0.0
    %74 = vmatpush1.msra.mxu0 0.0
    %75 = vmatprep.subr.mxu0 0.0
    %76 = vmatpush1.msra.mxu0 0.0
    %77 = vmatprep.subr.mxu0 0.0
    %78 = vmatpush1.msra.mxu0 0.0
    %79 = vmatprep.subr.mxu0 0.0
    %80 = vmatpush1.msra.mxu0 0.0
    %81 = vmatprep.subr.mxu0 0.0
    %82 = vmatpush1.msra.mxu0 0.0
    %83 = vmatprep.subr.mxu0 0.0
    %84 = vmatpush1.msra.mxu0 0.0
    %85 = vmatprep.subr.mxu0 0.0
    %86 = vmatpush1.msra.mxu0 0.0
    %87 = vmatprep.subr.mxu0 0.0
    %88 = vmatpush1.msra.mxu0 0.0
    %89 = vmatprep.subr.mxu0 0.0
    %90 = vmatpush1.msra.mxu0 0.0
    %91 = vmatprep.subr.mxu0 0.0
    %92 = vmatpush1.msra.mxu0 0.0
    %93 = vmatprep.subr.mxu0 0.0
    %94 = vmatpush1.msra.mxu0 0.0
    %95 = vmatprep.subr.mxu0 0.0
    %96 = vmatpush1.msra.mxu0 0.0
    %97 = vmatprep.subr.mxu0 0.0
    %98 = vmatpush1.msra.mxu0 0.0
    %99 = vmatprep.subr.mxu0 0.0
    %100 = vmatpush1.msra.mxu0 0.0
    %101 = vmatprep.subr.mxu0 0.0
    %102 = vmatpush1.msra.mxu0 0.0
    %103 = vmatprep.subr.mxu0 0.0
    %104 = vmatpush1.msra.mxu0 0.0
    %105 = vmatprep.subr.mxu0 0.0
    %106 = vmatpush1.msra.mxu0 0.0
    %107 = vmatprep.subr.mxu0 0.0
    %108 = vmatpush1.msra.mxu0 0.0
    %109 = vmatprep.subr.mxu0 0.0
    %110 = vmatpush1.msra.mxu0 0.0
    %111 = vmatprep.subr.mxu0 0.0
    %112 = vmatpush1.msra.mxu0 0.0
    %113 = vmatprep.subr.mxu0 0.0
    %114 = vmatpush1.msra.mxu0 0.0
    %115 = vmatprep.subr.mxu0 0.0
    %116 = vmatpush1.msra.mxu0 0.0
    %117 = vmatprep.subr.mxu0 0.0
    %118 = vmatpush1.msra.mxu0 0.0
    %119 = vmatprep.mubr.f32.mxu0 0.0
    %120 = vmatmul.mubr.f32.gmra.mrb[0].mxu0 %v53
    %v121 = vpop.f32.mrb[0].mxu0
    %v122 = vadd.f32 0.0, %v121
    %v123 = vpop.f32.mrb[0].mxu0
    %v124 = vadd.f32 0.0, %v123
    %125 = vdwg.mxu0
    %v127 = vlaneseq
    %v128 = vshrl.u32 %v127, 7
    %v129 = vsub.s32 0, %v128
    %v130 = vrot.slane %v44, %v129
    %v131 = vlaneseq
    %v132 = vshrl.u32 %v131, 7
    %v133 = vsub.s32 1, %v132
    %v134 = vrot.slane %v44, %v133
    %v137 = vsub.f32 %v122, %v130
    %v138 = vsub.f32 %v124, %v134
    %vm139 = vcmp.le.f32.partialorder %v122, %v130
    %vm140 = vcmp.le.f32.partialorder %v124, %v134
    %v141 = vsub.f32 1.0, %v46
    %v142 = vsub.f32 0.0, %v46
    %v144 = vlaneseq
    %v145 = vshrl.u32 %v144, 7
    %v146 = vsub.s32 0, %v145
    %v147 = vrot.slane %v141, %v146
    %v148 = vlaneseq
    %v149 = vshrl.u32 %v148, 7
    %v150 = vsub.s32 1, %v149
    %v151 = vrot.slane %v141, %v150
    %v155 = vlaneseq
    %v156 = vshrl.u32 %v155, 7
    %v157 = vsub.s32 0, %v156
    %v158 = vrot.slane %v142, %v157
    %v159 = vlaneseq
    %v160 = vshrl.u32 %v159, 7
    %v161 = vsub.s32 1, %v160
    %v162 = vrot.slane %v142, %v161
    %v165 = vsel %vm139, %v147, %v158
    %v166 = vsel %vm140, %v151, %v162
    %v167 = vmul.f32 %v137, %v165
    %v168 = vmul.f32 %v138, %v166
    %vm169 = vcmask 1040384
    %v170 = vsel %vm169, %v167, 0.0
    %vm171 = vcmask 122880
    %v172 = vsel %vm171, %v168, 0.0
    %v173 = vadd.f32 %v170, %v172
    %174 = vadd.xlane.f32.xlu0 %v173
    %v175 = vpop.xlane.xlu0 %174
    %v176 = vadd.f32 %v175, 0.0
    %177 = vst [vmem:[#allocation7] sm:$0x1] %v176
    // Predicated region
    $region26: #{tpu_custom_call.1} parent=1 // pred_check
      _
    $region27: #{tpu_custom_call.1} parent=1 // pred_check_branch
      %179 = sbr.rel (0) target = $region29
    $region28: #{tpu_custom_call.1} parent=1 // pred_region
      %s181 = ssub.s32 16, 16
      %182 = vsyncadd [#allocation4], %s181
      %s184 = sshll.u32 [#allocation7], 4
      %s185 = int_to_ptr.vmem [resolvable:$true] %s184
      %187 = dma.vmem_to_hbm [thread:$0]  %s185, 16, %s4, [#allocation4]
    $region29: #{tpu_custom_call.1} parent=1 // pred_fallthru
      _
    // Predicated region
    $region30: #{tpu_custom_call.1} parent=1 // pred_check
      _
    $region31: #{tpu_custom_call.1} parent=1 // pred_check_branch
      %189 = sbr.rel (0) target = $region33
    $region32: #{tpu_custom_call.1} parent=1 // pred_region
      %190 = dma.done [#allocation4], 16
    $region33: #{tpu_custom_call.1} parent=1 // pred_fallthru
      _
    %191 = vsyncpa [#allocation3], 1
    %192 = vsyncpa [#allocation6], 1
    %193 = vsyncpa [#allocation4], 1

</llo_original>
